<compile_context>
chip_gen: v7x
topology: tpu7x:2x2x1
jax: 0.10.0
libtpu: 0.0.40
codegen_flags: <defaults>
</compile_context>

<pallas_src>
import jax
import jax.numpy as jnp
from jax.experimental import pallas as pl
from jax.experimental.pallas import tpu as pltpu

LANE = 128        # vreg lane width
ROW_ALIGN = 16    # batch-tile row alignment (bf16 sublane packing of the output)


def _round_up(x, m):
    return (x + m - 1) // m * m


def _pad_to(arr, shape):
    pads = [(0, s - d) for d, s in zip(arr.shape, shape)]
    return jnp.pad(arr, pads)


def encoder_kernel(x_ref, w1_ref, b1_ref, w2_ref, b2_ref, wh_ref, bh_ref, out_ref):
    """Fused 3-layer MLP: LeakyReLU(LeakyReLU(xW1+b1)W2+b2)[Wm|Wv] + [bm|bv]."""
    # In-kernel bf16 cast of the activation; matmuls run on the MXU with f32
    # accumulation, bias-add + LeakyReLU epilogues stay in f32.
    x = x_ref[...].astype(jnp.bfloat16)

    h = jnp.dot(x, w1_ref[...], preferred_element_type=jnp.float32) + b1_ref[...]
    h = jnp.maximum(h, 0.2 * h).astype(jnp.bfloat16)

    h = jnp.dot(h, w2_ref[...], preferred_element_type=jnp.float32) + b2_ref[...]
    h = jnp.maximum(h, 0.2 * h).astype(jnp.bfloat16)

    out = jnp.dot(h, wh_ref[...], preferred_element_type=jnp.float32) + bh_ref[...]
    out_ref[...] = out.astype(out_ref.dtype)


def prepare_encoder_params(params):
    """One-time parameter prep: call once, reuse for every forward call.

    params: (w1, b1, w2, b2, wm, bm, wv, bv) with weights already transposed to
            [in_features, out_features] and biases as [1, out_features].
    Fuses the mean/var heads into one [H, 2L] matmul, zero-pads output axes to
    128 lanes and casts matmul operands to bf16 so the per-call wrapper never
    re-pads / re-casts weights (that wrapper traffic dominated before).
    """
    w1, b1, w2, b2, wm, bm, wv, bv = params
    D, H = w1.shape
    L = wm.shape[1]
    H_p = _round_up(H, LANE)
    O_p = _round_up(2 * L, LANE)

    w_head = jnp.concatenate([wm, wv], axis=1)     # [H, 2L]  (mean | log_var)
    b_head = jnp.concatenate([bm, bv], axis=1)     # [1, 2L]

    return dict(
        w1=_pad_to(w1, (D, H_p)).astype(jnp.bfloat16),
        b1=_pad_to(b1, (1, H_p)).astype(jnp.float32),
        w2=_pad_to(w2, (H_p, H_p)).astype(jnp.bfloat16),
        b2=_pad_to(b2, (1, H_p)).astype(jnp.float32),
        wh=_pad_to(w_head, (H_p, O_p)).astype(jnp.bfloat16),
        bh=_pad_to(b_head, (1, O_p)).astype(jnp.float32),
        input_dim=D, hidden_dim=H, latent_dim=L,
    )


def _choose_batch_tile(B, D, H_p, O_p, tb_max):
    """Biggest batch tile that fits the VMEM budget; >=2 tiles for big batches."""
    # Per-row VMEM bytes: double-buffered f32 x tile + bf16 out tile, plus the
    # f32/bf16 intermediates of the fused MLP.
    per_row = 2 * (D * 4 + O_p * 2) + 4 * H_p * 4
    tile_budget = 24 << 20   # leave headroom for the resident weights
    tb_cap = max(ROW_ALIGN, min(tb_max, (tile_budget // per_row) // ROW_ALIGN * ROW_ALIGN))

    if B <= tb_cap and B < 512:
        return B, B          # single full-extent tile, no batch padding at all
    # >= 2 grid steps so v7x's two TensorCores both get work.
    tb = min(tb_cap, _round_up(pl.cdiv(B, 2), ROW_ALIGN))
    return tb, _round_up(B, tb)


def _build_encoder_call(TB, B_p, D, H_p, O_p, vmem_limit, cost, single_buffer_weights):
    # Grid-invariant operands: request a single VMEM buffer (they are DMA'd
    # once); fall back to the default 2-deep pipeline if rejected (see caller).
    resident = {"pipeline_mode": pl.Buffered(1)} if single_buffer_weights else {}
    # TODO(synk): add a K-reduction grid axis over D (accumulate h1 in a VMEM
    # scratch, run layers 2/3 under pl.when(k == last)) for very large
    # input_dim so W1 need not be fully VMEM-resident on v7x (64 MiB).
    in_specs = [
        pl.BlockSpec((TB, D), lambda i: (i, 0)),                  # x: streamed over batch
        pl.BlockSpec((D, H_p), lambda i: (0, 0), **resident),     # W1 (VMEM resident)
        pl.BlockSpec((1, H_p), lambda i: (0, 0), **resident),     # b1
        pl.BlockSpec((H_p, H_p), lambda i: (0, 0), **resident),   # W2
        pl.BlockSpec((1, H_p), lambda i: (0, 0), **resident),     # b2
        pl.BlockSpec((H_p, O_p), lambda i: (0, 0), **resident),   # W_head (mean|var)
        pl.BlockSpec((1, O_p), lambda i: (0, 0), **resident),     # b_head
    ]
    return pl.pallas_call(
        encoder_kernel,
        out_shape=jax.ShapeDtypeStruct((B_p, O_p), jnp.bfloat16),
        grid=(B_p // TB,),
        in_specs=in_specs,
        out_specs=pl.BlockSpec((TB, O_p), lambda i: (i, 0)),
        compiler_params=pltpu.CompilerParams(
            dimension_semantics=("parallel",),
            vmem_limit_bytes=vmem_limit,
        ),
        cost_estimate=cost,
    )


def encoder_forward(x, prepped, *, tb_max=1024):
    """Batch-tiled, lane-padded, bf16-MXU Pallas encoder forward.

    x: [batch, input_dim] float array.  prepped: output of prepare_encoder_params.
    Returns (mean, log_var), each [batch, latent_dim] float32.
    """
    w1, b1, w2, b2, wh, bh = (prepped[k] for k in ("w1", "b1", "w2", "b2", "wh", "bh"))
    D, H, L = prepped["input_dim"], prepped["hidden_dim"], prepped["latent_dim"]

    B = x.shape[0]
    assert x.shape[1] == D
    H_p, O_p = w1.shape[1], wh.shape[1]

    TB, B_p = _choose_batch_tile(B, D, H_p, O_p, tb_max)
    x_p = x.astype(jnp.float32)
    if B_p != B:
        x_p = jnp.pad(x_p, ((0, B_p - B), (0, 0)))   # zero rows: mathematically neutral

    weight_bytes = (w1.size + w2.size + wh.size) * 2 + (b1.size + b2.size + bh.size) * 4
    io_bytes = 2 * TB * (D * 4 + O_p * 2) + 4 * TB * H_p * 4
    vmem_limit = int(min(64 << 20, max(32 << 20, 2 * (weight_bytes + io_bytes))))

    cost = pl.CostEstimate(
        flops=2 * B * (D * H + H * H + H * 2 * L),
        transcendentals=0,
        bytes_accessed=B * D * 4 + weight_bytes + B_p * O_p * 2,
    )

    args = (x_p, w1, b1, w2, b2, wh, bh)
    try:
        out = _build_encoder_call(TB, B_p, D, H_p, O_p, vmem_limit, cost, True)(*args)
    except Exception:
        # This JAX/Mosaic build rejects pl.Buffered(1) for grid-invariant
        # blocks -> fall back to the default 2-deep pipeline (costs only VMEM).
        out = _build_encoder_call(TB, B_p, D, H_p, O_p, vmem_limit, cost, False)(*args)

    head = out[:B].astype(jnp.float32)   # tiny [B, O_p] slab: split + upcast here
    return head[:, :L], head[:, L:2 * L]


def init_linear(key, in_features, out_features):
    """PyTorch-style nn.Linear init: U(-1/sqrt(fan_in), +1/sqrt(fan_in)).

    Returns weight transposed to [in_features, out_features], bias as [1, out].
    """
    kw, kb = jax.random.split(key)
    bound = 1.0 / jnp.sqrt(jnp.float32(in_features))
    w = jax.random.uniform(kw, (in_features, out_features), jnp.float32, -bound, bound)
    b = jax.random.uniform(kb, (1, out_features), jnp.float32, -bound, bound)
    return w, b


def reference_forward(x, params):
    """Pure-JAX f32 reference (matches the PyTorch module exactly)."""
    w1, b1, w2, b2, wm, bm, wv, bv = params

    def leaky(v):
        return jnp.where(v >= 0, v, 0.2 * v)

    h = leaky(x @ w1 + b1)
    h = leaky(h @ w2 + b2)
    return h @ wm + bm, h @ wv + bv


if __name__ == "__main__":
    # Small shapes consistent with the module: flat feature input.
    batch = 8
    input_dim = 64
    hidden_dim = 32
    latent_dim = 16

    key = jax.random.PRNGKey(0)
    kx, k1, k2, k3, k4 = jax.random.split(key, 5)

    x = jax.random.normal(kx, (batch, input_dim), jnp.float32)

    w1, b1 = init_linear(k1, input_dim, hidden_dim)
    w2, b2 = init_linear(k2, hidden_dim, hidden_dim)
    wm, bm = init_linear(k3, hidden_dim, latent_dim)
    wv, bv = init_linear(k4, hidden_dim, latent_dim)
    params = (w1, b1, w2, b2, wm, bm, wv, bv)

    # One-time parameter prep (hoisted out of the per-call path).
    prepped = prepare_encoder_params(params)

    mean, log_var = encoder_forward(x, prepped)
    jax.block_until_ready((mean, log_var))

    ref_mean, ref_logvar = reference_forward(x, params)

    assert mean.shape == (batch, latent_dim)
    assert log_var.shape == (batch, latent_dim)
    # bf16 matmul operands / bf16 head output (f32 accumulation) -> loose
    # tolerance vs the f32 reference.
    assert jnp.allclose(mean, ref_mean, atol=5e-2, rtol=5e-2)
    assert jnp.allclose(log_var, ref_logvar, atol=5e-2, rtol=5e-2)

    print("KERNEL_OK")
</pallas_src>

<mosaic_0001>
module attributes {stable_mosaic.version = 11 : i64} {
  func.func @encoder_kernel(%arg0: i32, %arg1: memref<8x64xf32, #tpu.memory_space<vmem>>, %arg2: memref<64x128xbf16, #tpu.memory_space<vmem>>, %arg3: memref<1x128xf32, #tpu.memory_space<vmem>>, %arg4: memref<128x128xbf16, #tpu.memory_space<vmem>>, %arg5: memref<1x128xf32, #tpu.memory_space<vmem>>, %arg6: memref<128x128xbf16, #tpu.memory_space<vmem>>, %arg7: memref<1x128xf32, #tpu.memory_space<vmem>>, %arg8: memref<8x128xbf16, #tpu.memory_space<vmem>>) attributes {dimension_semantics = [#tpu.dimension_semantics<parallel>], iteration_bounds = array<i64: 1>, scalar_prefetch = 0 : i64, scratch_operands = 0 : i64, tpu.core_type = #tpu.core_type<tc>, window_params = [{transform_indices = @transform_0, window_bounds = array<i64: 8, 64>}, {pipeline_mode = #tpu.pipeline_mode<synchronous>, transform_indices = @transform_1, window_bounds = array<i64: 64, 128>}, {pipeline_mode = #tpu.pipeline_mode<synchronous>, transform_indices = @transform_2, window_bounds = array<i64: 1, 128>}, {pipeline_mode = #tpu.pipeline_mode<synchronous>, transform_indices = @transform_3, window_bounds = array<i64: 128, 128>}, {pipeline_mode = #tpu.pipeline_mode<synchronous>, transform_indices = @transform_4, window_bounds = array<i64: 1, 128>}, {pipeline_mode = #tpu.pipeline_mode<synchronous>, transform_indices = @transform_5, window_bounds = array<i64: 128, 128>}, {pipeline_mode = #tpu.pipeline_mode<synchronous>, transform_indices = @transform_6, window_bounds = array<i64: 1, 128>}, {transform_indices = @transform_7, window_bounds = array<i64: 8, 128>}]} {
    %c0 = arith.constant 0 : index
    %c0_0 = arith.constant 0 : index
    %0 = vector.load %arg1[%c0, %c0_0] : memref<8x64xf32, #tpu.memory_space<vmem>>, vector<8x64xf32>
    %1 = arith.truncf %0 : vector<8x64xf32> to vector<8x64xbf16>
    %c0_1 = arith.constant 0 : index
    %c0_2 = arith.constant 0 : index
    %2 = vector.load %arg2[%c0_1, %c0_2] : memref<64x128xbf16, #tpu.memory_space<vmem>>, vector<64x128xbf16>
    %cst = arith.constant dense<0.000000e+00> : vector<8x128xf32>
    %3 = tpu.matmul %1, %2, %cst {dimension_numbers = #tpu.dot_dimension_numbers<[1], [0], [0], [1], [0, 0, 1, 1], [], []>} : vector<8x64xbf16>, vector<64x128xbf16>, vector<8x128xf32> -> vector<8x128xf32>
    %c0_3 = arith.constant 0 : index
    %c0_4 = arith.constant 0 : index
    %4 = vector.load %arg3[%c0_3, %c0_4] : memref<1x128xf32, #tpu.memory_space<vmem>>, vector<1x128xf32>
    %5 = vector.broadcast %4 : vector<1x128xf32> to vector<8x128xf32>
    %6 = arith.addf %3, %5 : vector<8x128xf32>
    %cst_5 = arith.constant 2.000000e-01 : f32
    %7 = vector.broadcast %cst_5 : f32 to vector<8x128xf32>
    %8 = arith.mulf %7, %6 : vector<8x128xf32>
    %9 = arith.maximumf %6, %8 : vector<8x128xf32>
    %10 = arith.truncf %9 : vector<8x128xf32> to vector<8x128xbf16>
    %c0_6 = arith.constant 0 : index
    %c0_7 = arith.constant 0 : index
    %11 = vector.load %arg4[%c0_6, %c0_7] : memref<128x128xbf16, #tpu.memory_space<vmem>>, vector<128x128xbf16>
    %cst_8 = arith.constant dense<0.000000e+00> : vector<8x128xf32>
    %12 = tpu.matmul %10, %11, %cst_8 {dimension_numbers = #tpu.dot_dimension_numbers<[1], [0], [0], [1], [0, 0, 1, 1], [], []>} : vector<8x128xbf16>, vector<128x128xbf16>, vector<8x128xf32> -> vector<8x128xf32>
    %c0_9 = arith.constant 0 : index
    %c0_10 = arith.constant 0 : index
    %13 = vector.load %arg5[%c0_9, %c0_10] : memref<1x128xf32, #tpu.memory_space<vmem>>, vector<1x128xf32>
    %14 = vector.broadcast %13 : vector<1x128xf32> to vector<8x128xf32>
    %15 = arith.addf %12, %14 : vector<8x128xf32>
    %cst_11 = arith.constant 2.000000e-01 : f32
    %16 = vector.broadcast %cst_11 : f32 to vector<8x128xf32>
    %17 = arith.mulf %16, %15 : vector<8x128xf32>
    %18 = arith.maximumf %15, %17 : vector<8x128xf32>
    %19 = arith.truncf %18 : vector<8x128xf32> to vector<8x128xbf16>
    %c0_12 = arith.constant 0 : index
    %c0_13 = arith.constant 0 : index
    %20 = vector.load %arg6[%c0_12, %c0_13] : memref<128x128xbf16, #tpu.memory_space<vmem>>, vector<128x128xbf16>
    %cst_14 = arith.constant dense<0.000000e+00> : vector<8x128xf32>
    %21 = tpu.matmul %19, %20, %cst_14 {dimension_numbers = #tpu.dot_dimension_numbers<[1], [0], [0], [1], [0, 0, 1, 1], [], []>} : vector<8x128xbf16>, vector<128x128xbf16>, vector<8x128xf32> -> vector<8x128xf32>
    %c0_15 = arith.constant 0 : index
    %c0_16 = arith.constant 0 : index
    %22 = vector.load %arg7[%c0_15, %c0_16] : memref<1x128xf32, #tpu.memory_space<vmem>>, vector<1x128xf32>
    %23 = vector.broadcast %22 : vector<1x128xf32> to vector<8x128xf32>
    %24 = arith.addf %21, %23 : vector<8x128xf32>
    %25 = arith.truncf %24 : vector<8x128xf32> to vector<8x128xbf16>
    %c0_17 = arith.constant 0 : index
    %c0_18 = arith.constant 0 : index
    %26 = vector.load %arg8[%c0_17, %c0_18] : memref<8x128xbf16, #tpu.memory_space<vmem>>, vector<8x128xbf16>
    tpu.vector_store %arg8[%c0_17, %c0_18], %25 {strides = array<i32>} : memref<8x128xbf16, #tpu.memory_space<vmem>>, vector<8x128xbf16>,
    return
  }
  func.func @transform_0(%arg0: i32) -> (i32, i32) {
    %c0_i32 = arith.constant 0 : i32
    %c0_i32_0 = arith.constant 0 : i32
    return %arg0, %c0_i32 : i32, i32
  }
  func.func @transform_1(%arg0: i32) -> (i32, i32) {
    %c0_i32 = arith.constant 0 : i32
    %c0_i32_0 = arith.constant 0 : i32
    %c0_i32_1 = arith.constant 0 : i32
    return %c0_i32, %c0_i32_0 : i32, i32
  }
  func.func @transform_2(%arg0: i32) -> (i32, i32) {
    %c0_i32 = arith.constant 0 : i32
    %c0_i32_0 = arith.constant 0 : i32
    %c0_i32_1 = arith.constant 0 : i32
    return %c0_i32, %c0_i32_0 : i32, i32
  }
  func.func @transform_3(%arg0: i32) -> (i32, i32) {
    %c0_i32 = arith.constant 0 : i32
    %c0_i32_0 = arith.constant 0 : i32
    %c0_i32_1 = arith.constant 0 : i32
    return %c0_i32, %c0_i32_0 : i32, i32
  }
  func.func @transform_4(%arg0: i32) -> (i32, i32) {
    %c0_i32 = arith.constant 0 : i32
    %c0_i32_0 = arith.constant 0 : i32
    %c0_i32_1 = arith.constant 0 : i32
    return %c0_i32, %c0_i32_0 : i32, i32
  }
  func.func @transform_5(%arg0: i32) -> (i32, i32) {
    %c0_i32 = arith.constant 0 : i32
    %c0_i32_0 = arith.constant 0 : i32
    %c0_i32_1 = arith.constant 0 : i32
    return %c0_i32, %c0_i32_0 : i32, i32
  }
  func.func @transform_6(%arg0: i32) -> (i32, i32) {
    %c0_i32 = arith.constant 0 : i32
    %c0_i32_0 = arith.constant 0 : i32
    %c0_i32_1 = arith.constant 0 : i32
    return %c0_i32, %c0_i32_0 : i32, i32
  }
  func.func @transform_7(%arg0: i32) -> (i32, i32) {
    %c0_i32 = arith.constant 0 : i32
    %c0_i32_0 = arith.constant 0 : i32
    return %arg0, %c0_i32 : i32, i32
  }
}

module attributes {stable_mosaic.version = 11 : i64} {
  func.func @encoder_kernel(%arg0: i32, %arg1: memref<8x64xf32, #tpu.memory_space<vmem>>, %arg2: memref<64x128xbf16, #tpu.memory_space<vmem>>, %arg3: memref<1x128xf32, #tpu.memory_space<vmem>>, %arg4: memref<128x128xbf16, #tpu.memory_space<vmem>>, %arg5: memref<1x128xf32, #tpu.memory_space<vmem>>, %arg6: memref<128x128xbf16, #tpu.memory_space<vmem>>, %arg7: memref<1x128xf32, #tpu.memory_space<vmem>>, %arg8: memref<8x128xbf16, #tpu.memory_space<vmem>>) attributes {dimension_semantics = [#tpu.dimension_semantics<parallel>], iteration_bounds = array<i64: 1>, scalar_prefetch = 0 : i64, scratch_operands = 0 : i64, tpu.core_type = #tpu.core_type<tc>, window_params = [{transform_indices = @transform_0, window_bounds = array<i64: 8, 64>}, {pipeline_mode = #tpu.pipeline_mode<synchronous>, transform_indices = @transform_1, window_bounds = array<i64: 64, 128>}, {pipeline_mode = #tpu.pipeline_mode<synchronous>, transform_indices = @transform_2, window_bounds = array<i64: 1, 128>}, {pipeline_mode = #tpu.pipeline_mode<synchronous>, transform_indices = @transform_3, window_bounds = array<i64: 128, 128>}, {pipeline_mode = #tpu.pipeline_mode<synchronous>, transform_indices = @transform_4, window_bounds = array<i64: 1, 128>}, {pipeline_mode = #tpu.pipeline_mode<synchronous>, transform_indices = @transform_5, window_bounds = array<i64: 128, 128>}, {pipeline_mode = #tpu.pipeline_mode<synchronous>, transform_indices = @transform_6, window_bounds = array<i64: 1, 128>}, {transform_indices = @transform_7, window_bounds = array<i64: 8, 128>}]} {
    %c0 = arith.constant 0 : index
    %c0_0 = arith.constant 0 : index
    %0 = vector.load %arg1[%c0, %c0_0] : memref<8x64xf32, #tpu.memory_space<vmem>>, vector<8x64xf32>
    %1 = arith.truncf %0 : vector<8x64xf32> to vector<8x64xbf16>
    %c0_1 = arith.constant 0 : index
    %c0_2 = arith.constant 0 : index
    %2 = vector.load %arg2[%c0_1, %c0_2] : memref<64x128xbf16, #tpu.memory_space<vmem>>, vector<64x128xbf16>
    %cst = arith.constant dense<0.000000e+00> : vector<8x128xf32>
    %3 = tpu.matmul %1, %2, %cst {dimension_numbers = #tpu.dot_dimension_numbers<[1], [0], [0], [1], [0, 0, 1, 1], [], []>} : vector<8x64xbf16>, vector<64x128xbf16>, vector<8x128xf32> -> vector<8x128xf32>
    %c0_3 = arith.constant 0 : index
    %c0_4 = arith.constant 0 : index
    %4 = vector.load %arg3[%c0_3, %c0_4] : memref<1x128xf32, #tpu.memory_space<vmem>>, vector<1x128xf32>
    %5 = vector.broadcast %4 : vector<1x128xf32> to vector<8x128xf32>
    %6 = arith.addf %3, %5 : vector<8x128xf32>
    %cst_5 = arith.constant 2.000000e-01 : f32
    %7 = vector.broadcast %cst_5 : f32 to vector<8x128xf32>
    %8 = arith.mulf %7, %6 : vector<8x128xf32>
    %9 = arith.maximumf %6, %8 : vector<8x128xf32>
    %10 = arith.truncf %9 : vector<8x128xf32> to vector<8x128xbf16>
    %c0_6 = arith.constant 0 : index
    %c0_7 = arith.constant 0 : index
    %11 = vector.load %arg4[%c0_6, %c0_7] : memref<128x128xbf16, #tpu.memory_space<vmem>>, vector<128x128xbf16>
    %cst_8 = arith.constant dense<0.000000e+00> : vector<8x128xf32>
    %12 = tpu.matmul %10, %11, %cst_8 {dimension_numbers = #tpu.dot_dimension_numbers<[1], [0], [0], [1], [0, 0, 1, 1], [], []>} : vector<8x128xbf16>, vector<128x128xbf16>, vector<8x128xf32> -> vector<8x128xf32>
    %c0_9 = arith.constant 0 : index
    %c0_10 = arith.constant 0 : index
    %13 = vector.load %arg5[%c0_9, %c0_10] : memref<1x128xf32, #tpu.memory_space<vmem>>, vector<1x128xf32>
    %14 = vector.broadcast %13 : vector<1x128xf32> to vector<8x128xf32>
    %15 = arith.addf %12, %14 : vector<8x128xf32>
    %cst_11 = arith.constant 2.000000e-01 : f32
    %16 = vector.broadcast %cst_11 : f32 to vector<8x128xf32>
    %17 = arith.mulf %16, %15 : vector<8x128xf32>
    %18 = arith.maximumf %15, %17 : vector<8x128xf32>
    %19 = arith.truncf %18 : vector<8x128xf32> to vector<8x128xbf16>
    %c0_12 = arith.constant 0 : index
    %c0_13 = arith.constant 0 : index
    %20 = vector.load %arg6[%c0_12, %c0_13] : memref<128x128xbf16, #tpu.memory_space<vmem>>, vector<128x128xbf16>
    %cst_14 = arith.constant dense<0.000000e+00> : vector<8x128xf32>
    %21 = tpu.matmul %19, %20, %cst_14 {dimension_numbers = #tpu.dot_dimension_numbers<[1], [0], [0], [1], [0, 0, 1, 1], [], []>} : vector<8x128xbf16>, vector<128x128xbf16>, vector<8x128xf32> -> vector<8x128xf32>
    %c0_15 = arith.constant 0 : index
    %c0_16 = arith.constant 0 : index
    %22 = vector.load %arg7[%c0_15, %c0_16] : memref<1x128xf32, #tpu.memory_space<vmem>>, vector<1x128xf32>
    %23 = vector.broadcast %22 : vector<1x128xf32> to vector<8x128xf32>
    %24 = arith.addf %21, %23 : vector<8x128xf32>
    %25 = arith.truncf %24 : vector<8x128xf32> to vector<8x128xbf16>
    %c0_17 = arith.constant 0 : index
    %c0_18 = arith.constant 0 : index
    %26 = vector.load %arg8[%c0_17, %c0_18] : memref<8x128xbf16, #tpu.memory_space<vmem>>, vector<8x128xbf16>
    tpu.vector_store %arg8[%c0_17, %c0_18], %25 {strides = array<i32>} : memref<8x128xbf16, #tpu.memory_space<vmem>>, vector<8x128xbf16>,
    return
  }
  func.func @transform_0(%arg0: i32) -> (i32, i32) {
    %c0_i32 = arith.constant 0 : i32
    %c0_i32_0 = arith.constant 0 : i32
    return %arg0, %c0_i32 : i32, i32
  }
  func.func @transform_1(%arg0: i32) -> (i32, i32) {
    %c0_i32 = arith.constant 0 : i32
    %c0_i32_0 = arith.constant 0 : i32
    %c0_i32_1 = arith.constant 0 : i32
    return %c0_i32, %c0_i32_0 : i32, i32
  }
  func.func @transform_2(%arg0: i32) -> (i32, i32) {
    %c0_i32 = arith.constant 0 : i32
    %c0_i32_0 = arith.constant 0 : i32
    %c0_i32_1 = arith.constant 0 : i32
    return %c0_i32, %c0_i32_0 : i32, i32
  }
  func.func @transform_3(%arg0: i32) -> (i32, i32) {
    %c0_i32 = arith.constant 0 : i32
    %c0_i32_0 = arith.constant 0 : i32
    %c0_i32_1 = arith.constant 0 : i32
    return %c0_i32, %c0_i32_0 : i32, i32
  }
  func.func @transform_4(%arg0: i32) -> (i32, i32) {
    %c0_i32 = arith.constant 0 : i32
    %c0_i32_0 = arith.constant 0 : i32
    %c0_i32_1 = arith.constant 0 : i32
    return %c0_i32, %c0_i32_0 : i32, i32
  }
  func.func @transform_5(%arg0: i32) -> (i32, i32) {
    %c0_i32 = arith.constant 0 : i32
    %c0_i32_0 = arith.constant 0 : i32
    %c0_i32_1 = arith.constant 0 : i32
    return %c0_i32, %c0_i32_0 : i32, i32
  }
  func.func @transform_6(%arg0: i32) -> (i32, i32) {
    %c0_i32 = arith.constant 0 : i32
    %c0_i32_0 = arith.constant 0 : i32
    %c0_i32_1 = arith.constant 0 : i32
    return %c0_i32, %c0_i32_0 : i32, i32
  }
  func.func @transform_7(%arg0: i32) -> (i32, i32) {
    %c0_i32 = arith.constant 0 : i32
    %c0_i32_0 = arith.constant 0 : i32
    return %arg0, %c0_i32 : i32, i32
  }
}

</mosaic_0001>

<llo_original>
// kernel: tpu_custom_call.1
$region0: #{tpu_custom_call.1}
  #allocation0 [shape = 'u32[]', space=smem, size = 0x4, offset = 0x4, fixed_abs, tag = 'smem constant byte address 0x4 - core index']
  #allocation1 [shape = 'u32[144,128]{1,0:T(1,128)}', space=vmem, size = 0x12000, scoped, tag = 'internal scratch']
  %s0 = inlined_call_operand.hbm [shape: f32[8,64], index: 0, kind: input, shape index: {}]
  %s1 = inlined_call_operand.hbm [shape: bf16[64,128], index: 1, kind: input, shape index: {}]
  %s2 = inlined_call_operand.vmem [shape: f32[1,128], index: 2, kind: input, shape index: {}]
  %s3 = inlined_call_operand.hbm [shape: bf16[128,128], index: 3, kind: input, shape index: {}]
  %s4 = inlined_call_operand.vmem [shape: f32[1,128], index: 4, kind: input, shape index: {}]
  %s5 = inlined_call_operand.hbm [shape: bf16[128,128], index: 5, kind: input, shape index: {}]
  %s6 = inlined_call_operand.vmem [shape: f32[1,128], index: 6, kind: input, shape index: {}]
  %s7 = inlined_call_operand.hbm [shape: bf16[8,128], index: 7, kind: output, shape index: {}]
  %s8 = sld [smem:[#allocation0]]
  $region54: #{tpu_custom_call.1} parent=0
    _
  %s10 = ssub.s32 1, %s8
  %s11 = scalar_select 0, %s10, %s8
  $region1: #{tpu_custom_call.1} parent=0
    #allocation2 [shape = 'u8[4096]{0}', space=vmem, size = 0x1000, scoped, tag = 'input window, operand 0, single buffered']
    #allocation3 [shape = 's32[1]{0}', space=sflag, size = 0x4, scoped, tag = 'scoped memory for tpu_custom_call.1']
    #allocation4 [shape = 's32[1]{0}', space=sflag, size = 0x4, scoped, tag = 'scoped memory for tpu_custom_call.1']
    #allocation5 [shape = 'u8[16384]{0}', space=vmem, size = 0x4000, scoped, tag = 'input window, operand 1, single buffered']
    #allocation6 [shape = 's32[1]{0}', space=sflag, size = 0x4, scoped, tag = 'scoped memory for tpu_custom_call.1']
    #allocation7 [shape = 'u8[32768]{0}', space=vmem, size = 0x8000, scoped, tag = 'input window, operand 3, single buffered']
    #allocation8 [shape = 'u8[32768]{0}', space=vmem, size = 0x8000, scoped, tag = 'input window, operand 5, single buffered']
    #allocation9 [shape = 's32[1]{0}', space=sflag, size = 0x4, scoped, tag = 'scoped memory for tpu_custom_call.1']
    #allocation10 [shape = 'u8[2048]{0}', space=vmem, size = 0x800, scoped, tag = 'output window, operand 0, single buffered']
    %12 = vsyncpa [#allocation3], 0
    %13 = vsyncpa [#allocation6], 0
    %14 = vsyncpa [#allocation9], 0
    %15 = vsyncpa [#allocation4], 0
    // Predicated region
    $region2: #{tpu_custom_call.1} parent=1 // pred_check
      _
    $region3: #{tpu_custom_call.1} parent=1 // pred_check_branch
      %17 = sbr.rel (0) target = $region5
    $region4: #{tpu_custom_call.1} parent=1 // pred_region
      %s19 = ssub.s32 128, 128
      %20 = vsyncadd [#allocation3], %s19
      %s22 = sshll.u32 [#allocation2], 4
      %s23 = int_to_ptr.vmem [resolvable:$true] %s22
      %25 = dma.hbm_to_vmem [thread:$0]  %s0, 128, %s23, [#allocation3]
    $region5: #{tpu_custom_call.1} parent=1 // pred_fallthru
      _
    // Predicated region
    $region6: #{tpu_custom_call.1} parent=1 // pred_check
      _
    $region7: #{tpu_custom_call.1} parent=1 // pred_check_branch
      %27 = sbr.rel (0) target = $region9
    $region8: #{tpu_custom_call.1} parent=1 // pred_region
      %s29 = ssub.s32 512, 512
      %30 = vsyncadd [#allocation6], %s29
      %s31 = sshll.u32 [#allocation5], 4
      %s32 = int_to_ptr.vmem [resolvable:$true] %s31
      %37 = dma.hbm_to_vmem [thread:$0]  %s1, 512, %s32, [#allocation6], 64, 64, 4
    $region9: #{tpu_custom_call.1} parent=1 // pred_fallthru
      _
    // Predicated region
    $region10: #{tpu_custom_call.1} parent=1 // pred_check
      _
    $region11: #{tpu_custom_call.1} parent=1 // pred_check_branch
      %39 = sbr.rel (0) target = $region13
    $region12: #{tpu_custom_call.1} parent=1 // pred_region
      _
    $region13: #{tpu_custom_call.1} parent=1 // pred_fallthru
      _
    // Predicated region
    $region14: #{tpu_custom_call.1} parent=1 // pred_check
      _
    $region15: #{tpu_custom_call.1} parent=1 // pred_check_branch
      %41 = sbr.rel (0) target = $region17
    $region16: #{tpu_custom_call.1} parent=1 // pred_region
      %s43 = ssub.s32 1024, 1024
      %44 = vsyncadd [#allocation6], %s43
      %s45 = sshll.u32 [#allocation7], 4
      %s46 = int_to_ptr.vmem [resolvable:$true] %s45
      %51 = dma.hbm_to_vmem [thread:$0]  %s3, 1024, %s46, [#allocation6], 64, 64, 4
    $region17: #{tpu_custom_call.1} parent=1 // pred_fallthru
      _
    // Predicated region
    $region18: #{tpu_custom_call.1} parent=1 // pred_check
      _
    $region19: #{tpu_custom_call.1} parent=1 // pred_check_branch
      %53 = sbr.rel (0) target = $region21
    $region20: #{tpu_custom_call.1} parent=1 // pred_region
      _
    $region21: #{tpu_custom_call.1} parent=1 // pred_fallthru
      _
    // Predicated region
    $region22: #{tpu_custom_call.1} parent=1 // pred_check
      _
    $region23: #{tpu_custom_call.1} parent=1 // pred_check_branch
      %55 = sbr.rel (0) target = $region25
    $region24: #{tpu_custom_call.1} parent=1 // pred_region
      %s57 = ssub.s32 1024, 1024
      %58 = vsyncadd [#allocation9], %s57
      %s59 = sshll.u32 [#allocation8], 4
      %s60 = int_to_ptr.vmem [resolvable:$true] %s59
      %65 = dma.hbm_to_vmem [thread:$0]  %s5, 1024, %s60, [#allocation9], 64, 64, 4
    $region25: #{tpu_custom_call.1} parent=1 // pred_fallthru
      _
    // Predicated region
    $region26: #{tpu_custom_call.1} parent=1 // pred_check
      _
    $region27: #{tpu_custom_call.1} parent=1 // pred_check_branch
      %67 = sbr.rel (0) target = $region29
    $region28: #{tpu_custom_call.1} parent=1 // pred_region
      _
    $region29: #{tpu_custom_call.1} parent=1 // pred_fallthru
      _
    // Predicated region
    $region30: #{tpu_custom_call.1} parent=1 // pred_check
      _
    $region31: #{tpu_custom_call.1} parent=1 // pred_check_branch
      %69 = sbr.rel (0) target = $region33
    $region32: #{tpu_custom_call.1} parent=1 // pred_region
      %70 = dma.done [#allocation3], 128
    $region33: #{tpu_custom_call.1} parent=1 // pred_fallthru
      _
    // Predicated region
    $region34: #{tpu_custom_call.1} parent=1 // pred_check
      _
    $region35: #{tpu_custom_call.1} parent=1 // pred_check_branch
      %72 = sbr.rel (0) target = $region37
    $region36: #{tpu_custom_call.1} parent=1 // pred_region
      %73 = dma.done [#allocation6], 512
    $region37: #{tpu_custom_call.1} parent=1 // pred_fallthru
      _
    // Predicated region
    $region38: #{tpu_custom_call.1} parent=1 // pred_check
      _
    $region39: #{tpu_custom_call.1} parent=1 // pred_check_branch
      %75 = sbr.rel (0) target = $region41
    $region40: #{tpu_custom_call.1} parent=1 // pred_region
      %76 = dma.done [#allocation6], 1024
    $region41: #{tpu_custom_call.1} parent=1 // pred_fallthru
      _
    // Predicated region
    $region42: #{tpu_custom_call.1} parent=1 // pred_check
      _
    $region43: #{tpu_custom_call.1} parent=1 // pred_check_branch
      %78 = sbr.rel (0) target = $region45
    $region44: #{tpu_custom_call.1} parent=1 // pred_region
      %79 = dma.done [#allocation9], 1024
    $region45: #{tpu_custom_call.1} parent=1 // pred_fallthru
      _
    %v81 = vld [vmem:[#allocation2] sm:$0xff]
    %v82 = vpack.c.bf16 %v81, %v81
    %v83 = vld [vmem:[#allocation5] sm:$0xf]
    %v84 = vld [vmem:[#allocation5 + $0x4] sm:$0xf]
    %v85 = vld [vmem:[#allocation5 + $0x8] sm:$0xf]
    %v86 = vld [vmem:[#allocation5 + $0xc] sm:$0xf]
    %v87 = vld [vmem:[#allocation5 + $0x10] sm:$0xf]
    %v88 = vld [vmem:[#allocation5 + $0x14] sm:$0xf]
    %v89 = vld [vmem:[#allocation5 + $0x18] sm:$0xf]
    %v90 = vld [vmem:[#allocation5 + $0x1c] sm:$0xf]
    %v91 = vld [vmem:[%s2] sm:$0x1]
    %v93 = vlaneseq
    %v94 = vshrl.u32 %v93, 7
    %v95 = vsub.s32 0, %v94
    %v96 = vrot.slane %v91, %v95
    %v106 = vunpack.c.l.b16 %v83
    %v107 = vunpack.c.l.b16 %v84
    %v108 = vunpack.c.l.b16 %v85
    %v109 = vunpack.c.l.b16 %v86
    %v110 = vunpack.c.l.b16 %v87
    %v111 = vunpack.c.l.b16 %v88
    %v112 = vunpack.c.l.b16 %v89
    %v113 = vunpack.c.l.b16 %v90
    %v114 = vpack.c.b16 %v107, %v106
    %v115 = vpack.c.b16 %v109, %v108
    %v116 = vpack.c.b16 %v111, %v110
    %v117 = vpack.c.b16 %v113, %v112
    %vm122 = vcmask 523264
    %v124 = vsel %vm122, %v82, 0
    %126 = vmatprep.subr.bf16.mxu0 0
    %127 = vmatpush1.bf16.msra.mxu0 %v114
    %128 = vmatprep.subr.bf16.mxu0 0
    %129 = vmatpush1.bf16.msra.mxu0 %v115
    %130 = vmatprep.subr.bf16.mxu0 0
    %131 = vmatpush1.bf16.msra.mxu0 %v116
    %132 = vmatprep.subr.bf16.mxu0 0
    %133 = vmatpush1.bf16.msra.mxu0 %v117
    %134 = vmatprep.subr.bf16.mxu0 0
    %135 = vmatpush1.bf16.msra.mxu0 0
    %136 = vmatprep.subr.bf16.mxu0 0
    %137 = vmatpush1.bf16.msra.mxu0 0
    %138 = vmatprep.subr.bf16.mxu0 0
    %139 = vmatpush1.bf16.msra.mxu0 0
    %140 = vmatprep.subr.bf16.mxu0 0
    %141 = vmatpush1.bf16.msra.mxu0 0
    %142 = vmatprep.subr.bf16.mxu0 0
    %143 = vmatpush1.bf16.msra.mxu0 0
    %144 = vmatprep.subr.bf16.mxu0 0
    %145 = vmatpush1.bf16.msra.mxu0 0
    %146 = vmatprep.subr.bf16.mxu0 0
    %147 = vmatpush1.bf16.msra.mxu0 0
    %148 = vmatprep.subr.bf16.mxu0 0
    %149 = vmatpush1.bf16.msra.mxu0 0
    %150 = vmatprep.subr.bf16.mxu0 0
    %151 = vmatpush1.bf16.msra.mxu0 0
    %152 = vmatprep.subr.bf16.mxu0 0
    %153 = vmatpush1.bf16.msra.mxu0 0
    %154 = vmatprep.subr.bf16.mxu0 0
    %155 = vmatpush1.bf16.msra.mxu0 0
    %156 = vmatprep.subr.bf16.mxu0 0
    %157 = vmatpush1.bf16.msra.mxu0 0
    %158 = vmatprep.mubr.bf16.mxu0 0
    %159 = vmatmul.mubr.bf16.gmra.mrb[0].mxu0 %v124
    %v160 = vpop.f32.mrb[0].mxu0
    %v161 = vadd.f32 %v96, %v160
    %v162 = vpop.f32.mrb[0].mxu0
    %v163 = vpop.f32.mrb[0].mxu0
    %v164 = vpop.f32.mrb[0].mxu0
    %165 = vdwg.mxu0
    %v166 = vmul.f32 %v161, 0.2
    %v167 = vmax.f32 %v161, %v166
    %v168 = vpack.c.bf16 %v167, %v167
    %v169 = vld [vmem:[#allocation7] sm:$0xf]
    %v170 = vld [vmem:[#allocation7 + $0x4] sm:$0xf]
    %v171 = vld [vmem:[#allocation7 + $0x8] sm:$0xf]
    %v172 = vld [vmem:[#allocation7 + $0xc] sm:$0xf]
    %v173 = vld [vmem:[#allocation7 + $0x10] sm:$0xf]
    %v174 = vld [vmem:[#allocation7 + $0x14] sm:$0xf]
    %v175 = vld [vmem:[#allocation7 + $0x18] sm:$0xf]
    %v176 = vld [vmem:[#allocation7 + $0x1c] sm:$0xf]
    %v177 = vld [vmem:[#allocation7 + $0x20] sm:$0xf]
    %v178 = vld [vmem:[#allocation7 + $0x24] sm:$0xf]
    %v179 = vld [vmem:[#allocation7 + $0x28] sm:$0xf]
    %v180 = vld [vmem:[#allocation7 + $0x2c] sm:$0xf]
    %v181 = vld [vmem:[#allocation7 + $0x30] sm:$0xf]
    %v182 = vld [vmem:[#allocation7 + $0x34] sm:$0xf]
    %v183 = vld [vmem:[#allocation7 + $0x38] sm:$0xf]
    %v184 = vld [vmem:[#allocation7 + $0x3c] sm:$0xf]
    %v185 = vld [vmem:[%s4] sm:$0x1]
    %v187 = vlaneseq
    %v188 = vshrl.u32 %v187, 7
    %v189 = vsub.s32 0, %v188
    %v190 = vrot.slane %v185, %v189
    %v208 = vunpack.c.l.b16 %v169
    %v209 = vunpack.c.l.b16 %v170
    %v210 = vunpack.c.l.b16 %v171
    %v211 = vunpack.c.l.b16 %v172
    %v212 = vunpack.c.l.b16 %v173
    %v213 = vunpack.c.l.b16 %v174
    %v214 = vunpack.c.l.b16 %v175
    %v215 = vunpack.c.l.b16 %v176
    %v216 = vunpack.c.l.b16 %v177
    %v217 = vunpack.c.l.b16 %v178
    %v218 = vunpack.c.l.b16 %v179
    %v219 = vunpack.c.l.b16 %v180
    %v220 = vunpack.c.l.b16 %v181
    %v221 = vunpack.c.l.b16 %v182
    %v222 = vunpack.c.l.b16 %v183
    %v223 = vunpack.c.l.b16 %v184
    %v224 = vpack.c.b16 %v209, %v208
    %v225 = vpack.c.b16 %v211, %v210
    %v226 = vpack.c.b16 %v213, %v212
    %v227 = vpack.c.b16 %v215, %v214
    %v228 = vpack.c.b16 %v217, %v216
    %v229 = vpack.c.b16 %v219, %v218
    %v230 = vpack.c.b16 %v221, %v220
    %v231 = vpack.c.b16 %v223, %v222
    %240 = vmatprep.subr.bf16.mxu0 0
    %241 = vmatpush1.bf16.msra.mxu0 %v224
    %242 = vmatprep.subr.bf16.mxu0 0
    %243 = vmatpush1.bf16.msra.mxu0 %v225
    %244 = vmatprep.subr.bf16.mxu0 0
    %245 = vmatpush1.bf16.msra.mxu0 %v226
    %246 = vmatprep.subr.bf16.mxu0 0
    %247 = vmatpush1.bf16.msra.mxu0 %v227
    %248 = vmatprep.subr.bf16.mxu0 0
    %249 = vmatpush1.bf16.msra.mxu0 %v228
    %250 = vmatprep.subr.bf16.mxu0 0
    %251 = vmatpush1.bf16.msra.mxu0 %v229
    %252 = vmatprep.subr.bf16.mxu0 0
    %253 = vmatpush1.bf16.msra.mxu0 %v230
    %254 = vmatprep.subr.bf16.mxu0 0
    %255 = vmatpush1.bf16.msra.mxu0 %v231
    %256 = vmatprep.subr.bf16.mxu0 0
    %257 = vmatpush1.bf16.msra.mxu0 0
    %258 = vmatprep.subr.bf16.mxu0 0
    %259 = vmatpush1.bf16.msra.mxu0 0
    %260 = vmatprep.subr.bf16.mxu0 0
    %261 = vmatpush1.bf16.msra.mxu0 0
    %262 = vmatprep.subr.bf16.mxu0 0
    %263 = vmatpush1.bf16.msra.mxu0 0
    %264 = vmatprep.subr.bf16.mxu0 0
    %265 = vmatpush1.bf16.msra.mxu0 0
    %266 = vmatprep.subr.bf16.mxu0 0
    %267 = vmatpush1.bf16.msra.mxu0 0
    %268 = vmatprep.subr.bf16.mxu0 0
    %269 = vmatpush1.bf16.msra.mxu0 0
    %270 = vmatprep.subr.bf16.mxu0 0
    %271 = vmatpush1.bf16.msra.mxu0 0
    %272 = vmatprep.mubr.bf16.mxu0 0
    %273 = vmatmul.mubr.bf16.gmra.mrb[0].mxu0 %v168
    %v274 = vpop.f32.mrb[0].mxu0
    %v275 = vadd.f32 %v190, %v274
    %v276 = vpop.f32.mrb[0].mxu0
    %v277 = vpop.f32.mrb[0].mxu0
    %v278 = vpop.f32.mrb[0].mxu0
    %279 = vdwg.mxu0
    %v280 = vmul.f32 %v275, 0.2
    %v281 = vmax.f32 %v275, %v280
    %v282 = vpack.c.bf16 %v281, %v281
    %v283 = vld [vmem:[#allocation8] sm:$0xf]
    %v284 = vld [vmem:[#allocation8 + $0x4] sm:$0xf]
    %v285 = vld [vmem:[#allocation8 + $0x8] sm:$0xf]
    %v286 = vld [vmem:[#allocation8 + $0xc] sm:$0xf]
    %v287 = vld [vmem:[#allocation8 + $0x10] sm:$0xf]
    %v288 = vld [vmem:[#allocation8 + $0x14] sm:$0xf]
    %v289 = vld [vmem:[#allocation8 + $0x18] sm:$0xf]
    %v290 = vld [vmem:[#allocation8 + $0x1c] sm:$0xf]
    %v291 = vld [vmem:[#allocation8 + $0x20] sm:$0xf]
    %v292 = vld [vmem:[#allocation8 + $0x24] sm:$0xf]
    %v293 = vld [vmem:[#allocation8 + $0x28] sm:$0xf]
    %v294 = vld [vmem:[#allocation8 + $0x2c] sm:$0xf]
    %v295 = vld [vmem:[#allocation8 + $0x30] sm:$0xf]
    %v296 = vld [vmem:[#allocation8 + $0x34] sm:$0xf]
    %v297 = vld [vmem:[#allocation8 + $0x38] sm:$0xf]
    %v298 = vld [vmem:[#allocation8 + $0x3c] sm:$0xf]
    %v299 = vld [vmem:[%s6] sm:$0x1]
    %v301 = vlaneseq
    %v302 = vshrl.u32 %v301, 7
    %v303 = vsub.s32 0, %v302
    %v304 = vrot.slane %v299, %v303
    %v322 = vunpack.c.l.b16 %v283
    %v323 = vunpack.c.l.b16 %v284
    %v324 = vunpack.c.l.b16 %v285
    %v325 = vunpack.c.l.b16 %v286
    %v326 = vunpack.c.l.b16 %v287
    %v327 = vunpack.c.l.b16 %v288
    %v328 = vunpack.c.l.b16 %v289
    %v329 = vunpack.c.l.b16 %v290
    %v330 = vunpack.c.l.b16 %v291
    %v331 = vunpack.c.l.b16 %v292
    %v332 = vunpack.c.l.b16 %v293
    %v333 = vunpack.c.l.b16 %v294
    %v334 = vunpack.c.l.b16 %v295
    %v335 = vunpack.c.l.b16 %v296
    %v336 = vunpack.c.l.b16 %v297
    %v337 = vunpack.c.l.b16 %v298
    %v338 = vpack.c.b16 %v323, %v322
    %v339 = vpack.c.b16 %v325, %v324
    %v340 = vpack.c.b16 %v327, %v326
    %v341 = vpack.c.b16 %v329, %v328
    %v342 = vpack.c.b16 %v331, %v330
    %v343 = vpack.c.b16 %v333, %v332
    %v344 = vpack.c.b16 %v335, %v334
    %v345 = vpack.c.b16 %v337, %v336
    %354 = vmatprep.subr.bf16.mxu0 0
    %355 = vmatpush1.bf16.msra.mxu0 %v338
    %356 = vmatprep.subr.bf16.mxu0 0
    %357 = vmatpush1.bf16.msra.mxu0 %v339
    %358 = vmatprep.subr.bf16.mxu0 0
    %359 = vmatpush1.bf16.msra.mxu0 %v340
    %360 = vmatprep.subr.bf16.mxu0 0
    %361 = vmatpush1.bf16.msra.mxu0 %v341
    %362 = vmatprep.subr.bf16.mxu0 0
    %363 = vmatpush1.bf16.msra.mxu0 %v342
    %364 = vmatprep.subr.bf16.mxu0 0
    %365 = vmatpush1.bf16.msra.mxu0 %v343
    %366 = vmatprep.subr.bf16.mxu0 0
    %367 = vmatpush1.bf16.msra.mxu0 %v344
    %368 = vmatprep.subr.bf16.mxu0 0
    %369 = vmatpush1.bf16.msra.mxu0 %v345
    %370 = vmatprep.subr.bf16.mxu0 0
    %371 = vmatpush1.bf16.msra.mxu0 0
    %372 = vmatprep.subr.bf16.mxu0 0
    %373 = vmatpush1.bf16.msra.mxu0 0
    %374 = vmatprep.subr.bf16.mxu0 0
    %375 = vmatpush1.bf16.msra.mxu0 0
    %376 = vmatprep.subr.bf16.mxu0 0
    %377 = vmatpush1.bf16.msra.mxu0 0
    %378 = vmatprep.subr.bf16.mxu0 0
    %379 = vmatpush1.bf16.msra.mxu0 0
    %380 = vmatprep.subr.bf16.mxu0 0
    %381 = vmatpush1.bf16.msra.mxu0 0
    %382 = vmatprep.subr.bf16.mxu0 0
    %383 = vmatpush1.bf16.msra.mxu0 0
    %384 = vmatprep.subr.bf16.mxu0 0
    %385 = vmatpush1.bf16.msra.mxu0 0
    %386 = vmatprep.mubr.bf16.mxu0 0
    %387 = vmatmul.mubr.bf16.gmra.mrb[0].mxu0 %v282
    %v388 = vpop.f32.mrb[0].mxu0
    %v389 = vadd.f32 %v304, %v388
    %v390 = vpop.f32.mrb[0].mxu0
    %v391 = vpop.f32.mrb[0].mxu0
    %v392 = vpop.f32.mrb[0].mxu0
    %393 = vdwg.mxu0
    %v394 = vpack.c.bf16 %v389, %v389
    %395 = vst [vmem:[#allocation10] sm:$0xf] %v394
    // Predicated region
    $region46: #{tpu_custom_call.1} parent=1 // pred_check
      _
    $region47: #{tpu_custom_call.1} parent=1 // pred_check_branch
      %397 = sbr.rel (0) target = $region49
    $region48: #{tpu_custom_call.1} parent=1 // pred_region
      %s399 = ssub.s32 64, 64
      %400 = vsyncadd [#allocation4], %s399
      %s402 = sshll.u32 [#allocation10], 4
      %s403 = int_to_ptr.vmem [resolvable:$true] %s402
      %405 = dma.vmem_to_hbm [thread:$0]  %s403, 64, %s7, [#allocation4]
    $region49: #{tpu_custom_call.1} parent=1 // pred_fallthru
      _
    // Predicated region
    $region50: #{tpu_custom_call.1} parent=1 // pred_check
      _
    $region51: #{tpu_custom_call.1} parent=1 // pred_check_branch
      %407 = sbr.rel (0) target = $region53
    $region52: #{tpu_custom_call.1} parent=1 // pred_region
      %408 = dma.done [#allocation4], 64
    $region53: #{tpu_custom_call.1} parent=1 // pred_fallthru
      _
    %409 = vsyncpa [#allocation3], 1
    %410 = vsyncpa [#allocation6], 1
    %411 = vsyncpa [#allocation9], 1
    %412 = vsyncpa [#allocation4], 1

// kernel: tpu_custom_call.1
$region0: #{tpu_custom_call.1}
  #allocation0 [shape = 'u32[]', space=smem, size = 0x4, offset = 0x4, fixed_abs, tag = 'smem constant byte address 0x4 - core index']
  #allocation1 [shape = 'u32[144,128]{1,0:T(1,128)}', space=vmem, size = 0x12000, scoped, tag = 'internal scratch']
  %s0 = inlined_call_operand.hbm [shape: f32[8,64], index: 0, kind: input, shape index: {}]
  %s1 = inlined_call_operand.hbm [shape: bf16[64,128], index: 1, kind: input, shape index: {}]
  %s2 = inlined_call_operand.vmem [shape: f32[1,128], index: 2, kind: input, shape index: {}]
  %s3 = inlined_call_operand.hbm [shape: bf16[128,128], index: 3, kind: input, shape index: {}]
  %s4 = inlined_call_operand.vmem [shape: f32[1,128], index: 4, kind: input, shape index: {}]
  %s5 = inlined_call_operand.hbm [shape: bf16[128,128], index: 5, kind: input, shape index: {}]
  %s6 = inlined_call_operand.vmem [shape: f32[1,128], index: 6, kind: input, shape index: {}]
  %s7 = inlined_call_operand.hbm [shape: bf16[8,128], index: 7, kind: output, shape index: {}]
  %s8 = sld [smem:[#allocation0]]
  $region54: #{tpu_custom_call.1} parent=0
    _
  %s10 = ssub.s32 1, %s8
  %s11 = scalar_select 0, %s10, %s8
  $region1: #{tpu_custom_call.1} parent=0
    #allocation2 [shape = 'u8[4096]{0}', space=vmem, size = 0x1000, scoped, tag = 'input window, operand 0, single buffered']
    #allocation3 [shape = 's32[1]{0}', space=sflag, size = 0x4, scoped, tag = 'scoped memory for tpu_custom_call.1']
    #allocation4 [shape = 's32[1]{0}', space=sflag, size = 0x4, scoped, tag = 'scoped memory for tpu_custom_call.1']
    #allocation5 [shape = 'u8[16384]{0}', space=vmem, size = 0x4000, scoped, tag = 'input window, operand 1, single buffered']
    #allocation6 [shape = 's32[1]{0}', space=sflag, size = 0x4, scoped, tag = 'scoped memory for tpu_custom_call.1']
    #allocation7 [shape = 'u8[32768]{0}', space=vmem, size = 0x8000, scoped, tag = 'input window, operand 3, single buffered']
    #allocation8 [shape = 'u8[32768]{0}', space=vmem, size = 0x8000, scoped, tag = 'input window, operand 5, single buffered']
    #allocation9 [shape = 's32[1]{0}', space=sflag, size = 0x4, scoped, tag = 'scoped memory for tpu_custom_call.1']
    #allocation10 [shape = 'u8[2048]{0}', space=vmem, size = 0x800, scoped, tag = 'output window, operand 0, single buffered']
    %12 = vsyncpa [#allocation3], 0
    %13 = vsyncpa [#allocation6], 0
    %14 = vsyncpa [#allocation9], 0
    %15 = vsyncpa [#allocation4], 0
    // Predicated region
    $region2: #{tpu_custom_call.1} parent=1 // pred_check
      _
    $region3: #{tpu_custom_call.1} parent=1 // pred_check_branch
      %17 = sbr.rel (0) target = $region5
    $region4: #{tpu_custom_call.1} parent=1 // pred_region
      %s19 = ssub.s32 128, 128
      %20 = vsyncadd [#allocation3], %s19
      %s22 = sshll.u32 [#allocation2], 4
      %s23 = int_to_ptr.vmem [resolvable:$true] %s22
      %25 = dma.hbm_to_vmem [thread:$0]  %s0, 128, %s23, [#allocation3]
    $region5: #{tpu_custom_call.1} parent=1 // pred_fallthru
      _
    // Predicated region
    $region6: #{tpu_custom_call.1} parent=1 // pred_check
      _
    $region7: #{tpu_custom_call.1} parent=1 // pred_check_branch
      %27 = sbr.rel (0) target = $region9
    $region8: #{tpu_custom_call.1} parent=1 // pred_region
      %s29 = ssub.s32 512, 512
      %30 = vsyncadd [#allocation6], %s29
      %s31 = sshll.u32 [#allocation5], 4
      %s32 = int_to_ptr.vmem [resolvable:$true] %s31
      %37 = dma.hbm_to_vmem [thread:$0]  %s1, 512, %s32, [#allocation6], 64, 64, 4
    $region9: #{tpu_custom_call.1} parent=1 // pred_fallthru
      _
    // Predicated region
    $region10: #{tpu_custom_call.1} parent=1 // pred_check
      _
    $region11: #{tpu_custom_call.1} parent=1 // pred_check_branch
      %39 = sbr.rel (0) target = $region13
    $region12: #{tpu_custom_call.1} parent=1 // pred_region
      _
    $region13: #{tpu_custom_call.1} parent=1 // pred_fallthru
      _
    // Predicated region
    $region14: #{tpu_custom_call.1} parent=1 // pred_check
      _
    $region15: #{tpu_custom_call.1} parent=1 // pred_check_branch
      %41 = sbr.rel (0) target = $region17
    $region16: #{tpu_custom_call.1} parent=1 // pred_region
      %s43 = ssub.s32 1024, 1024
      %44 = vsyncadd [#allocation6], %s43
      %s45 = sshll.u32 [#allocation7], 4
      %s46 = int_to_ptr.vmem [resolvable:$true] %s45
      %51 = dma.hbm_to_vmem [thread:$0]  %s3, 1024, %s46, [#allocation6], 64, 64, 4
    $region17: #{tpu_custom_call.1} parent=1 // pred_fallthru
      _
    // Predicated region
    $region18: #{tpu_custom_call.1} parent=1 // pred_check
      _
    $region19: #{tpu_custom_call.1} parent=1 // pred_check_branch
      %53 = sbr.rel (0) target = $region21
    $region20: #{tpu_custom_call.1} parent=1 // pred_region
      _
    $region21: #{tpu_custom_call.1} parent=1 // pred_fallthru
      _
    // Predicated region
    $region22: #{tpu_custom_call.1} parent=1 // pred_check
      _
    $region23: #{tpu_custom_call.1} parent=1 // pred_check_branch
      %55 = sbr.rel (0) target = $region25
    $region24: #{tpu_custom_call.1} parent=1 // pred_region
      %s57 = ssub.s32 1024, 1024
      %58 = vsyncadd [#allocation9], %s57
      %s59 = sshll.u32 [#allocation8], 4
      %s60 = int_to_ptr.vmem [resolvable:$true] %s59
      %65 = dma.hbm_to_vmem [thread:$0]  %s5, 1024, %s60, [#allocation9], 64, 64, 4
    $region25: #{tpu_custom_call.1} parent=1 // pred_fallthru
      _
    // Predicated region
    $region26: #{tpu_custom_call.1} parent=1 // pred_check
      _
    $region27: #{tpu_custom_call.1} parent=1 // pred_check_branch
      %67 = sbr.rel (0) target = $region29
    $region28: #{tpu_custom_call.1} parent=1 // pred_region
      _
    $region29: #{tpu_custom_call.1} parent=1 // pred_fallthru
      _
    // Predicated region
    $region30: #{tpu_custom_call.1} parent=1 // pred_check
      _
    $region31: #{tpu_custom_call.1} parent=1 // pred_check_branch
      %69 = sbr.rel (0) target = $region33
    $region32: #{tpu_custom_call.1} parent=1 // pred_region
      %70 = dma.done [#allocation3], 128
    $region33: #{tpu_custom_call.1} parent=1 // pred_fallthru
      _
    // Predicated region
    $region34: #{tpu_custom_call.1} parent=1 // pred_check
      _
    $region35: #{tpu_custom_call.1} parent=1 // pred_check_branch
      %72 = sbr.rel (0) target = $region37
    $region36: #{tpu_custom_call.1} parent=1 // pred_region
      %73 = dma.done [#allocation6], 512
    $region37: #{tpu_custom_call.1} parent=1 // pred_fallthru
      _
    // Predicated region
    $region38: #{tpu_custom_call.1} parent=1 // pred_check
      _
    $region39: #{tpu_custom_call.1} parent=1 // pred_check_branch
      %75 = sbr.rel (0) target = $region41
    $region40: #{tpu_custom_call.1} parent=1 // pred_region
      %76 = dma.done [#allocation6], 1024
    $region41: #{tpu_custom_call.1} parent=1 // pred_fallthru
      _
    // Predicated region
    $region42: #{tpu_custom_call.1} parent=1 // pred_check
      _
    $region43: #{tpu_custom_call.1} parent=1 // pred_check_branch
      %78 = sbr.rel (0) target = $region45
    $region44: #{tpu_custom_call.1} parent=1 // pred_region
      %79 = dma.done [#allocation9], 1024
    $region45: #{tpu_custom_call.1} parent=1 // pred_fallthru
      _
    %v81 = vld [vmem:[#allocation2] sm:$0xff]
    %v82 = vpack.c.bf16 %v81, %v81
    %v83 = vld [vmem:[#allocation5] sm:$0xf]
    %v84 = vld [vmem:[#allocation5 + $0x4] sm:$0xf]
    %v85 = vld [vmem:[#allocation5 + $0x8] sm:$0xf]
    %v86 = vld [vmem:[#allocation5 + $0xc] sm:$0xf]
    %v87 = vld [vmem:[#allocation5 + $0x10] sm:$0xf]
    %v88 = vld [vmem:[#allocation5 + $0x14] sm:$0xf]
    %v89 = vld [vmem:[#allocation5 + $0x18] sm:$0xf]
    %v90 = vld [vmem:[#allocation5 + $0x1c] sm:$0xf]
    %v91 = vld [vmem:[%s2] sm:$0x1]
    %v93 = vlaneseq
    %v94 = vshrl.u32 %v93, 7
    %v95 = vsub.s32 0, %v94
    %v96 = vrot.slane %v91, %v95
    %v106 = vunpack.c.l.b16 %v83
    %v107 = vunpack.c.l.b16 %v84
    %v108 = vunpack.c.l.b16 %v85
    %v109 = vunpack.c.l.b16 %v86
    %v110 = vunpack.c.l.b16 %v87
    %v111 = vunpack.c.l.b16 %v88
    %v112 = vunpack.c.l.b16 %v89
    %v113 = vunpack.c.l.b16 %v90
    %v114 = vpack.c.b16 %v107, %v106
    %v115 = vpack.c.b16 %v109, %v108
    %v116 = vpack.c.b16 %v111, %v110
    %v117 = vpack.c.b16 %v113, %v112
    %vm122 = vcmask 523264
    %v124 = vsel %vm122, %v82, 0
    %126 = vmatprep.subr.bf16.mxu0 0
    %127 = vmatpush1.bf16.msra.mxu0 %v114
    %128 = vmatprep.subr.bf16.mxu0 0
    %129 = vmatpush1.bf16.msra.mxu0 %v115
    %130 = vmatprep.subr.bf16.mxu0 0
    %131 = vmatpush1.bf16.msra.mxu0 %v116
    %132 = vmatprep.subr.bf16.mxu0 0
    %133 = vmatpush1.bf16.msra.mxu0 %v117
    %134 = vmatprep.subr.bf16.mxu0 0
    %135 = vmatpush1.bf16.msra.mxu0 0
    %136 = vmatprep.subr.bf16.mxu0 0
    %137 = vmatpush1.bf16.msra.mxu0 0
    %138 = vmatprep.subr.bf16.mxu0 0
    %139 = vmatpush1.bf16.msra.mxu0 0
    %140 = vmatprep.subr.bf16.mxu0 0
    %141 = vmatpush1.bf16.msra.mxu0 0
    %142 = vmatprep.subr.bf16.mxu0 0
    %143 = vmatpush1.bf16.msra.mxu0 0
    %144 = vmatprep.subr.bf16.mxu0 0
    %145 = vmatpush1.bf16.msra.mxu0 0
    %146 = vmatprep.subr.bf16.mxu0 0
    %147 = vmatpush1.bf16.msra.mxu0 0
    %148 = vmatprep.subr.bf16.mxu0 0
    %149 = vmatpush1.bf16.msra.mxu0 0
    %150 = vmatprep.subr.bf16.mxu0 0
    %151 = vmatpush1.bf16.msra.mxu0 0
    %152 = vmatprep.subr.bf16.mxu0 0
    %153 = vmatpush1.bf16.msra.mxu0 0
    %154 = vmatprep.subr.bf16.mxu0 0
    %155 = vmatpush1.bf16.msra.mxu0 0
    %156 = vmatprep.subr.bf16.mxu0 0
    %157 = vmatpush1.bf16.msra.mxu0 0
    %158 = vmatprep.mubr.bf16.mxu0 0
    %159 = vmatmul.mubr.bf16.gmra.mrb[0].mxu0 %v124
    %v160 = vpop.f32.mrb[0].mxu0
    %v161 = vadd.f32 %v96, %v160
    %v162 = vpop.f32.mrb[0].mxu0
    %v163 = vpop.f32.mrb[0].mxu0
    %v164 = vpop.f32.mrb[0].mxu0
    %165 = vdwg.mxu0
    %v166 = vmul.f32 %v161, 0.2
    %v167 = vmax.f32 %v161, %v166
    %v168 = vpack.c.bf16 %v167, %v167
    %v169 = vld [vmem:[#allocation7] sm:$0xf]
    %v170 = vld [vmem:[#allocation7 + $0x4] sm:$0xf]
    %v171 = vld [vmem:[#allocation7 + $0x8] sm:$0xf]
    %v172 = vld [vmem:[#allocation7 + $0xc] sm:$0xf]
    %v173 = vld [vmem:[#allocation7 + $0x10] sm:$0xf]
    %v174 = vld [vmem:[#allocation7 + $0x14] sm:$0xf]
    %v175 = vld [vmem:[#allocation7 + $0x18] sm:$0xf]
    %v176 = vld [vmem:[#allocation7 + $0x1c] sm:$0xf]
    %v177 = vld [vmem:[#allocation7 + $0x20] sm:$0xf]
    %v178 = vld [vmem:[#allocation7 + $0x24] sm:$0xf]
    %v179 = vld [vmem:[#allocation7 + $0x28] sm:$0xf]
    %v180 = vld [vmem:[#allocation7 + $0x2c] sm:$0xf]
    %v181 = vld [vmem:[#allocation7 + $0x30] sm:$0xf]
    %v182 = vld [vmem:[#allocation7 + $0x34] sm:$0xf]
    %v183 = vld [vmem:[#allocation7 + $0x38] sm:$0xf]
    %v184 = vld [vmem:[#allocation7 + $0x3c] sm:$0xf]
    %v185 = vld [vmem:[%s4] sm:$0x1]
    %v187 = vlaneseq
    %v188 = vshrl.u32 %v187, 7
    %v189 = vsub.s32 0, %v188
    %v190 = vrot.slane %v185, %v189
    %v208 = vunpack.c.l.b16 %v169
    %v209 = vunpack.c.l.b16 %v170
    %v210 = vunpack.c.l.b16 %v171
    %v211 = vunpack.c.l.b16 %v172
    %v212 = vunpack.c.l.b16 %v173
    %v213 = vunpack.c.l.b16 %v174
    %v214 = vunpack.c.l.b16 %v175
    %v215 = vunpack.c.l.b16 %v176
    %v216 = vunpack.c.l.b16 %v177
    %v217 = vunpack.c.l.b16 %v178
    %v218 = vunpack.c.l.b16 %v179
    %v219 = vunpack.c.l.b16 %v180
    %v220 = vunpack.c.l.b16 %v181
    %v221 = vunpack.c.l.b16 %v182
    %v222 = vunpack.c.l.b16 %v183
    %v223 = vunpack.c.l.b16 %v184
    %v224 = vpack.c.b16 %v209, %v208
    %v225 = vpack.c.b16 %v211, %v210
    %v226 = vpack.c.b16 %v213, %v212
    %v227 = vpack.c.b16 %v215, %v214
    %v228 = vpack.c.b16 %v217, %v216
    %v229 = vpack.c.b16 %v219, %v218
    %v230 = vpack.c.b16 %v221, %v220
    %v231 = vpack.c.b16 %v223, %v222
    %240 = vmatprep.subr.bf16.mxu0 0
    %241 = vmatpush1.bf16.msra.mxu0 %v224
    %242 = vmatprep.subr.bf16.mxu0 0
    %243 = vmatpush1.bf16.msra.mxu0 %v225
    %244 = vmatprep.subr.bf16.mxu0 0
    %245 = vmatpush1.bf16.msra.mxu0 %v226
    %246 = vmatprep.subr.bf16.mxu0 0
    %247 = vmatpush1.bf16.msra.mxu0 %v227
    %248 = vmatprep.subr.bf16.mxu0 0
    %249 = vmatpush1.bf16.msra.mxu0 %v228
    %250 = vmatprep.subr.bf16.mxu0 0
    %251 = vmatpush1.bf16.msra.mxu0 %v229
    %252 = vmatprep.subr.bf16.mxu0 0
    %253 = vmatpush1.bf16.msra.mxu0 %v230
    %254 = vmatprep.subr.bf16.mxu0 0
    %255 = vmatpush1.bf16.msra.mxu0 %v231
    %256 = vmatprep.subr.bf16.mxu0 0
    %257 = vmatpush1.bf16.msra.mxu0 0
    %258 = vmatprep.subr.bf16.mxu0 0
    %259 = vmatpush1.bf16.msra.mxu0 0
    %260 = vmatprep.subr.bf16.mxu0 0
    %261 = vmatpush1.bf16.msra.mxu0 0
    %262 = vmatprep.subr.bf16.mxu0 0
    %263 = vmatpush1.bf16.msra.mxu0 0
    %264 = vmatprep.subr.bf16.mxu0 0
    %265 = vmatpush1.bf16.msra.mxu0 0
    %266 = vmatprep.subr.bf16.mxu0 0
    %267 = vmatpush1.bf16.msra.mxu0 0
    %268 = vmatprep.subr.bf16.mxu0 0
    %269 = vmatpush1.bf16.msra.mxu0 0
    %270 = vmatprep.subr.bf16.mxu0 0
    %271 = vmatpush1.bf16.msra.mxu0 0
    %272 = vmatprep.mubr.bf16.mxu0 0
    %273 = vmatmul.mubr.bf16.gmra.mrb[0].mxu0 %v168
    %v274 = vpop.f32.mrb[0].mxu0
    %v275 = vadd.f32 %v190, %v274
    %v276 = vpop.f32.mrb[0].mxu0
    %v277 = vpop.f32.mrb[0].mxu0
    %v278 = vpop.f32.mrb[0].mxu0
    %279 = vdwg.mxu0
    %v280 = vmul.f32 %v275, 0.2
    %v281 = vmax.f32 %v275, %v280
    %v282 = vpack.c.bf16 %v281, %v281
    %v283 = vld [vmem:[#allocation8] sm:$0xf]
    %v284 = vld [vmem:[#allocation8 + $0x4] sm:$0xf]
    %v285 = vld [vmem:[#allocation8 + $0x8] sm:$0xf]
    %v286 = vld [vmem:[#allocation8 + $0xc] sm:$0xf]
    %v287 = vld [vmem:[#allocation8 + $0x10] sm:$0xf]
    %v288 = vld [vmem:[#allocation8 + $0x14] sm:$0xf]
    %v289 = vld [vmem:[#allocation8 + $0x18] sm:$0xf]
    %v290 = vld [vmem:[#allocation8 + $0x1c] sm:$0xf]
    %v291 = vld [vmem:[#allocation8 + $0x20] sm:$0xf]
    %v292 = vld [vmem:[#allocation8 + $0x24] sm:$0xf]
    %v293 = vld [vmem:[#allocation8 + $0x28] sm:$0xf]
    %v294 = vld [vmem:[#allocation8 + $0x2c] sm:$0xf]
    %v295 = vld [vmem:[#allocation8 + $0x30] sm:$0xf]
    %v296 = vld [vmem:[#allocation8 + $0x34] sm:$0xf]
    %v297 = vld [vmem:[#allocation8 + $0x38] sm:$0xf]
    %v298 = vld [vmem:[#allocation8 + $0x3c] sm:$0xf]
    %v299 = vld [vmem:[%s6] sm:$0x1]
    %v301 = vlaneseq
    %v302 = vshrl.u32 %v301, 7
    %v303 = vsub.s32 0, %v302
    %v304 = vrot.slane %v299, %v303
    %v322 = vunpack.c.l.b16 %v283
    %v323 = vunpack.c.l.b16 %v284
    %v324 = vunpack.c.l.b16 %v285
    %v325 = vunpack.c.l.b16 %v286
    %v326 = vunpack.c.l.b16 %v287
    %v327 = vunpack.c.l.b16 %v288
    %v328 = vunpack.c.l.b16 %v289
    %v329 = vunpack.c.l.b16 %v290
    %v330 = vunpack.c.l.b16 %v291
    %v331 = vunpack.c.l.b16 %v292
    %v332 = vunpack.c.l.b16 %v293
    %v333 = vunpack.c.l.b16 %v294
    %v334 = vunpack.c.l.b16 %v295
    %v335 = vunpack.c.l.b16 %v296
    %v336 = vunpack.c.l.b16 %v297
    %v337 = vunpack.c.l.b16 %v298
    %v338 = vpack.c.b16 %v323, %v322
    %v339 = vpack.c.b16 %v325, %v324
    %v340 = vpack.c.b16 %v327, %v326
    %v341 = vpack.c.b16 %v329, %v328
    %v342 = vpack.c.b16 %v331, %v330
    %v343 = vpack.c.b16 %v333, %v332
    %v344 = vpack.c.b16 %v335, %v334
    %v345 = vpack.c.b16 %v337, %v336
    %354 = vmatprep.subr.bf16.mxu0 0
    %355 = vmatpush1.bf16.msra.mxu0 %v338
    %356 = vmatprep.subr.bf16.mxu0 0
    %357 = vmatpush1.bf16.msra.mxu0 %v339
    %358 = vmatprep.subr.bf16.mxu0 0
    %359 = vmatpush1.bf16.msra.mxu0 %v340
    %360 = vmatprep.subr.bf16.mxu0 0
    %361 = vmatpush1.bf16.msra.mxu0 %v341
    %362 = vmatprep.subr.bf16.mxu0 0
    %363 = vmatpush1.bf16.msra.mxu0 %v342
    %364 = vmatprep.subr.bf16.mxu0 0
    %365 = vmatpush1.bf16.msra.mxu0 %v343
    %366 = vmatprep.subr.bf16.mxu0 0
    %367 = vmatpush1.bf16.msra.mxu0 %v344
    %368 = vmatprep.subr.bf16.mxu0 0
    %369 = vmatpush1.bf16.msra.mxu0 %v345
    %370 = vmatprep.subr.bf16.mxu0 0
    %371 = vmatpush1.bf16.msra.mxu0 0
    %372 = vmatprep.subr.bf16.mxu0 0
    %373 = vmatpush1.bf16.msra.mxu0 0
    %374 = vmatprep.subr.bf16.mxu0 0
    %375 = vmatpush1.bf16.msra.mxu0 0
    %376 = vmatprep.subr.bf16.mxu0 0
    %377 = vmatpush1.bf16.msra.mxu0 0
    %378 = vmatprep.subr.bf16.mxu0 0
    %379 = vmatpush1.bf16.msra.mxu0 0
    %380 = vmatprep.subr.bf16.mxu0 0
    %381 = vmatpush1.bf16.msra.mxu0 0
    %382 = vmatprep.subr.bf16.mxu0 0
    %383 = vmatpush1.bf16.msra.mxu0 0
    %384 = vmatprep.subr.bf16.mxu0 0
    %385 = vmatpush1.bf16.msra.mxu0 0
    %386 = vmatprep.mubr.bf16.mxu0 0
    %387 = vmatmul.mubr.bf16.gmra.mrb[0].mxu0 %v282
    %v388 = vpop.f32.mrb[0].mxu0
    %v389 = vadd.f32 %v304, %v388
    %v390 = vpop.f32.mrb[0].mxu0
    %v391 = vpop.f32.mrb[0].mxu0
    %v392 = vpop.f32.mrb[0].mxu0
    %393 = vdwg.mxu0
    %v394 = vpack.c.bf16 %v389, %v389
    %395 = vst [vmem:[#allocation10] sm:$0xf] %v394
    // Predicated region
    $region46: #{tpu_custom_call.1} parent=1 // pred_check
      _
    $region47: #{tpu_custom_call.1} parent=1 // pred_check_branch
      %397 = sbr.rel (0) target = $region49
    $region48: #{tpu_custom_call.1} parent=1 // pred_region
      %s399 = ssub.s32 64, 64
      %400 = vsyncadd [#allocation4], %s399
      %s402 = sshll.u32 [#allocation10], 4
      %s403 = int_to_ptr.vmem [resolvable:$true] %s402
      %405 = dma.vmem_to_hbm [thread:$0]  %s403, 64, %s7, [#allocation4]
    $region49: #{tpu_custom_call.1} parent=1 // pred_fallthru
      _
    // Predicated region
    $region50: #{tpu_custom_call.1} parent=1 // pred_check
      _
    $region51: #{tpu_custom_call.1} parent=1 // pred_check_branch
      %407 = sbr.rel (0) target = $region53
    $region52: #{tpu_custom_call.1} parent=1 // pred_region
      %408 = dma.done [#allocation4], 64
    $region53: #{tpu_custom_call.1} parent=1 // pred_fallthru
      _
    %409 = vsyncpa [#allocation3], 1
    %410 = vsyncpa [#allocation6], 1
    %411 = vsyncpa [#allocation9], 1
    %412 = vsyncpa [#allocation4], 1

</llo_original>
